<compile_context>
chip_gen: v7x
topology: tpu7x:2x2x1
jax: 0.10.0
libtpu: 0.0.40
codegen_flags: <defaults>
</compile_context>

<pallas_src>
import functools

import jax
import jax.numpy as jnp
from jax.experimental import pallas as pl
from jax.experimental.pallas import tpu as pltpu

GAMMA_NEG = 4.0
GAMMA_POS = 1.0
CLIP = 0.05
EPS = 1e-8


def _cdiv(a, b):
    return (a + b - 1) // b


def _round_up(a, b):
    return _cdiv(a, b) * b


def _sublane_multiple(dtype):
    # f32 -> 8, bf16/f16 -> 16, int8/bool -> 32 sublane packing.
    return {4: 8, 2: 16, 1: 32}.get(jnp.dtype(dtype).itemsize, 8)


def _default_num_partials():
    """Two partials only pay on chips with two TensorCores (v4/v5p megacore, v7x)."""
    try:
        kind = jax.devices()[0].device_kind.lower()
    except Exception:
        return 1
    return 2 if any(tag in kind for tag in ("v7", "v5p", "v4")) else 1


def _int_pow(base, k):
    """base ** k for a non-negative Python int k via repeated squaring (VPU only).

    _int_pow(base, 1) returns `base` directly (no ops), so the gamma_pos == 1
    default stays free."""
    if k == 0:
        return jnp.ones_like(base)
    result = None
    cur = base
    while k:
        if k & 1:
            result = cur if result is None else result * cur
        k >>= 1
        if k:
            cur = cur * cur
    return result


def _asl_kernel(x_ref, y_ref, out_ref, *,
                gamma_neg, gamma_pos, clip, eps, hard_targets,
                rows_total, cols_total, tile_m, tile_n, acc_rows,
                m_half, m_tiles, n_tiles,
                need_row_mask, need_col_mask, clamp_rows):
    c = pl.program_id(0)   # partial / megacore axis ("parallel")
    i = pl.program_id(1)   # batch-tile axis within this partial ("arbitrary")
    j = pl.program_id(2)   # label-tile axis ("arbitrary")
    t = c * m_half + i     # global row-tile index (may overhang when clamp_rows)

    # The output block (c, 0) stays resident across the whole (i, j) sweep and
    # doubles as the accumulator.  Zero it on the first step of this partial
    # (unconditionally, even if that step happens to be an overhang step).
    @pl.when((i == 0) & (j == 0))
    def _():
        out_ref[...] = jnp.zeros_like(out_ref)

    def compute_and_accumulate():
        x = x_ref[...].astype(jnp.float32)
        y = y_ref[...].astype(jnp.float32)

        # sigmoid(x) = 0.5 * tanh(0.5 * x) + 0.5  -> one EUP op, not exp+recip.
        th = jnp.tanh(0.5 * x)
        xs_pos = 0.5 * th + 0.5
        xs_neg = 0.5 - 0.5 * th
        if clip is not None and clip > 0:
            xs_neg = jnp.minimum(xs_neg + clip, 1.0)

        use_focal = (gamma_neg > 0) or (gamma_pos > 0)
        int_gammas = (float(gamma_neg).is_integer() and float(gamma_pos).is_integer()
                      and gamma_neg >= 0 and gamma_pos >= 0)

        if hard_targets:
            # y is multi-hot {0,1}: collapse the pos/neg branches with a select.
            y_pos = y > 0.0
            sel = jnp.where(y_pos, xs_pos, xs_neg)       # clipped xs_neg for y == 0
            loss = jnp.log(jnp.maximum(sel, eps))         # one log instead of two
            if use_focal:
                base = 1.0 - sel                          # == 1 - xs_pos*y - xs_neg*(1-y)
                if int_gammas:                            # VPU-only focal weight
                    w = jnp.where(y_pos,
                                  _int_pow(base, int(gamma_pos)),
                                  _int_pow(base, int(gamma_neg)))
                else:
                    expo = jnp.where(y_pos, jnp.float32(gamma_pos),
                                     jnp.float32(gamma_neg))
                    w = jnp.power(base, expo)
                loss = loss * w
        else:
            # Soft-target path: exact transcription of the PyTorch module.
            anti = 1.0 - y
            loss = y * jnp.log(jnp.maximum(xs_pos, eps))
            loss = loss + anti * jnp.log(jnp.maximum(xs_neg, eps))
            if use_focal:
                xp = xs_pos * y
                xn = xs_neg * anti
                w = jnp.power(1.0 - xp - xn, gamma_pos * y + gamma_neg * anti)
                loss = loss * w

        def accumulate(contrib):
            # Fold (tile_m, tile_n) onto the (acc_rows, tile_n) accumulator with
            # plain VPU adds; the reshape only splits the leading dim so it is
            # layout-preserving w.r.t. the (8, 128) vreg tiling.
            if tile_m != acc_rows:
                folded = contrib.reshape(tile_m // acc_rows, acc_rows, tile_n).sum(axis=0)
            else:
                folded = contrib
            out_ref[...] += folded

        if need_row_mask or need_col_mask:
            # Only the last row/col tile pays for iota + compare + select;
            # interior tiles take the unmasked branch.
            is_edge = None
            if need_row_mask:
                is_edge = (t == m_tiles - 1)
            if need_col_mask:
                col_edge = (j == n_tiles - 1)
                is_edge = col_edge if is_edge is None else (is_edge | col_edge)

            @pl.when(jnp.logical_not(is_edge))
            def _():
                accumulate(loss)

            @pl.when(is_edge)
            def _():
                mask = None
                if need_row_mask:
                    rows = (t * tile_m
                            + jax.lax.broadcasted_iota(jnp.int32, (tile_m, tile_n), 0))
                    mask = rows < rows_total
                if need_col_mask:
                    cols = (j * tile_n
                            + jax.lax.broadcasted_iota(jnp.int32, (tile_m, tile_n), 1))
                    cmask = cols < cols_total
                    mask = cmask if mask is None else (mask & cmask)
                # Must be a select: padded rows went through tanh/log.
                accumulate(jnp.where(mask, loss, 0.0))
        else:
            accumulate(loss)

    if clamp_rows:
        # Uneven partial split: overhang steps re-DMA the (clamped) last valid
        # block but skip all EUP/VPU compute and accumulation.
        @pl.when(t < m_tiles)
        def _():
            compute_and_accumulate()
    else:
        compute_and_accumulate()


def asymmetric_loss(x, y, *, gamma_neg=GAMMA_NEG, gamma_pos=GAMMA_POS,
                    clip=CLIP, eps=EPS, hard_targets=True,
                    num_partials=None, target_block_bytes=1 << 20,
                    max_tile_n=8192):
    """x: logits [M, N]; y: multi-hot targets [M, N]. Returns scalar -sum(loss).

    hard_targets=True assumes y is a binarized multi-label vector (the module's
    documented contract).  Pass hard_targets=False for soft / smoothed labels
    to get the exact PyTorch math."""
    M, N = x.shape
    assert y.shape == (M, N)

    if num_partials is None:
        num_partials = _default_num_partials()

    row_mult = max(_sublane_multiple(x.dtype), _sublane_multiple(y.dtype))

    # Lane (label) tiling: prefer the full row (one contiguous HBM transfer per
    # block, no column mask); fall back to multiple-of-128 tiles for huge N.
    if N <= max_tile_n:
        tile_n = N
    else:
        tile_n = max_tile_n - (max_tile_n % 128)

    # Sublane (batch) tiling: ~target_block_bytes per f32 block, multiple of the
    # sublane packing, never exceeding M rounded down to that multiple.
    if M <= row_mult:
        tile_m = M                                     # full (possibly unaligned) batch
    else:
        rows = max(row_mult, target_block_bytes // (4 * tile_n))
        rows = _round_up(rows, row_mult)
        tile_m = min(rows, (M // row_mult) * row_mult)

    m_tiles = _cdiv(M, tile_m)
    n_tiles = _cdiv(N, tile_n)
    num_partials = max(1, min(num_partials, m_tiles))
    m_half = _cdiv(m_tiles, num_partials)

    need_row_mask = (M % tile_m) != 0                  # last row tile is partial
    need_col_mask = (N % tile_n) != 0                  # last col tile is partial
    clamp_rows = (num_partials * m_half) > m_tiles     # uneven split across partials

    if clamp_rows:
        def in_map(c, i, j):
            # Overhang steps re-read the last valid block (compute is skipped
            # in-kernel), keeping the DMA in bounds.
            return (jnp.minimum(c * m_half + i, m_tiles - 1), j)
    else:
        def in_map(c, i, j):
            return (c * m_half + i, j)

    acc_rows = 8 if tile_m % 8 == 0 else tile_m        # lane-dense accumulator rows

    kernel = functools.partial(
        _asl_kernel,
        gamma_neg=gamma_neg, gamma_pos=gamma_pos, clip=clip, eps=eps,
        hard_targets=hard_targets,
        rows_total=M, cols_total=N, tile_m=tile_m, tile_n=tile_n,
        acc_rows=acc_rows, m_half=m_half, m_tiles=m_tiles, n_tiles=n_tiles,
        need_row_mask=need_row_mask, need_col_mask=need_col_mask,
        clamp_rows=clamp_rows)

    partials = pl.pallas_call(
        kernel,
        out_shape=jax.ShapeDtypeStruct((num_partials * acc_rows, tile_n), jnp.float32),
        grid_spec=pltpu.PrefetchScalarGridSpec(
            num_scalar_prefetch=0,
            grid=(num_partials, m_half, n_tiles),
            in_specs=[
                pl.BlockSpec((tile_m, tile_n), in_map),
                pl.BlockSpec((tile_m, tile_n), in_map),
            ],
            out_specs=pl.BlockSpec((acc_rows, tile_n), lambda c, i, j: (c, 0)),
        ),
        compiler_params=pltpu.CompilerParams(
            dimension_semantics=("parallel", "arbitrary", "arbitrary"),
            vmem_limit_bytes=32 * 1024 * 1024,
        ),
    )(x, y)

    # Tiny final reduction over the per-partial lane-dense slabs + the negation.
    return -jnp.sum(partials)


def asymmetric_loss_ref(x, y, *, gamma_neg=GAMMA_NEG, gamma_pos=GAMMA_POS,
                        clip=CLIP, eps=EPS):
    """Pure-JAX transcription of the PyTorch AsymmetricLoss.forward."""
    x = x.astype(jnp.float32)
    y = y.astype(jnp.float32)
    anti = 1.0 - y
    xs_pos = jax.nn.sigmoid(x)
    xs_neg = 1.0 - xs_pos
    if clip is not None and clip > 0:
        xs_neg = jnp.minimum(xs_neg + clip, 1.0)
    loss = y * jnp.log(jnp.maximum(xs_pos, eps))
    loss = loss + anti * jnp.log(jnp.maximum(xs_neg, eps))
    if gamma_neg > 0 or gamma_pos > 0:
        xp = xs_pos * y
        xn = xs_neg * anti
        w = jnp.power(1.0 - xp - xn, gamma_pos * y + gamma_neg * anti)
        loss = loss * w
    return -jnp.sum(loss)


# TODO(synk): disable_torch_grad_focal_loss is an autograd-mode toggle with no
# effect on the forward value; it has no Pallas equivalent and is omitted.


if __name__ == "__main__":
    keys = jax.random.split(jax.random.PRNGKey(0), 10)

    def check(out, ref):
        assert jnp.allclose(out, ref, rtol=1e-4, atol=1e-3), (out, ref)

    # 1) Small multi-label head: batch=16 samples, 128 labels, single tile.
    M, N = 16, 128
    x = jax.random.normal(keys[0], (M, N), dtype=jnp.float32)
    y = jax.random.bernoulli(keys[1], p=0.3, shape=(M, N)).astype(jnp.float32)
    check(jax.block_until_ready(asymmetric_loss(x, y)),
          jax.block_until_ready(asymmetric_loss_ref(x, y)))

    # 2) Non-divisible batch (20 rows, 16-row tiles): exercises the edge-row-mask
    #    branch that interior tiles now skip.
    M2, N2 = 20, 200
    x2 = jax.random.normal(keys[2], (M2, N2), dtype=jnp.float32)
    y2 = jax.random.bernoulli(keys[3], p=0.3, shape=(M2, N2)).astype(jnp.float32)
    check(jax.block_until_ready(asymmetric_loss(x2, y2)),
          jax.block_until_ready(asymmetric_loss_ref(x2, y2)))

    # 3) Uneven 2-partial split with tiny blocks (3 row tiles over 2 partials):
    #    exercises the compute-skipped overhang step.
    M3, N3 = 24, 200
    x3 = jax.random.normal(keys[4], (M3, N3), dtype=jnp.float32)
    y3 = jax.random.bernoulli(keys[5], p=0.3, shape=(M3, N3)).astype(jnp.float32)
    check(jax.block_until_ready(
              asymmetric_loss(x3, y3, num_partials=2, target_block_bytes=4096)),
          jax.block_until_ready(asymmetric_loss_ref(x3, y3)))

    # 4) Narrow dtypes end-to-end: bf16 logits + int8 multi-hot targets
    #    (upcast happens in-kernel; HBM traffic drops ~2.7x vs f32 inputs).
    M4, N4 = 32, 256
    x4 = jax.random.normal(keys[6], (M4, N4), dtype=jnp.float32).astype(jnp.bfloat16)
    y4 = jax.random.bernoulli(keys[7], p=0.3, shape=(M4, N4)).astype(jnp.int8)
    check(jax.block_until_ready(asymmetric_loss(x4, y4)),
          jax.block_until_ready(asymmetric_loss_ref(x4.astype(jnp.float32),
                                                    y4.astype(jnp.float32))))

    # 5) Soft / smoothed labels via the exact-transcription path.
    y5 = jax.random.uniform(keys[8], (M, N), dtype=jnp.float32)
    check(jax.block_until_ready(asymmetric_loss(x, y5, hard_targets=False)),
          jax.block_until_ready(asymmetric_loss_ref(x, y5)))

    print("KERNEL_OK")
</pallas_src>

<mosaic_0001>
module attributes {stable_mosaic.version = 11 : i64} {
  func.func @_asl_kernel(%arg0: i32, %arg1: i32, %arg2: i32, %arg3: memref<16x128xf32, #tpu.memory_space<vmem>>, %arg4: memref<16x128xf32, #tpu.memory_space<vmem>>, %arg5: memref<8x128xf32, #tpu.memory_space<vmem>>) attributes {dimension_semantics = [#tpu.dimension_semantics<parallel>, #tpu.dimension_semantics<arbitrary>, #tpu.dimension_semantics<arbitrary>], iteration_bounds = array<i64: 1, 1, 1>, scalar_prefetch = 0 : i64, scratch_operands = 0 : i64, tpu.core_type = #tpu.core_type<tc>, window_params = [{transform_indices = @transform_0, window_bounds = array<i64: 16, 128>}, {transform_indices = @transform_1, window_bounds = array<i64: 16, 128>}, {transform_indices = @transform_2, window_bounds = array<i64: 8, 128>}]} {
    %c0_i32 = arith.constant 0 : i32
    %0 = arith.cmpi eq, %arg1, %c0_i32 : i32
    %c0_i32_0 = arith.constant 0 : i32
    %1 = arith.cmpi eq, %arg2, %c0_i32_0 : i32
    %2 = arith.andi %0, %1 : i1
    %3 = arith.extui %2 : i1 to i32
    %c0_i32_1 = arith.constant 0 : i32
    %4 = arith.cmpi ne, %3, %c0_i32_1 : i32
    scf.if %4 {
      %cst_19 = arith.constant 0.000000e+00 : f32
      %39 = vector.broadcast %cst_19 : f32 to vector<8x128xf32>
      %c0_20 = arith.constant 0 : index
      %c0_21 = arith.constant 0 : index
      %40 = vector.load %arg5[%c0_20, %c0_21] : memref<8x128xf32, #tpu.memory_space<vmem>>, vector<8x128xf32>
      tpu.vector_store %arg5[%c0_20, %c0_21], %39 {strides = array<i32>} : memref<8x128xf32, #tpu.memory_space<vmem>>, vector<8x128xf32>,
    } else {
    }
    %c0 = arith.constant 0 : index
    %c0_2 = arith.constant 0 : index
    %5 = vector.load %arg3[%c0, %c0_2] : memref<16x128xf32, #tpu.memory_space<vmem>>, vector<16x128xf32>
    %c0_3 = arith.constant 0 : index
    %c0_4 = arith.constant 0 : index
    %6 = vector.load %arg4[%c0_3, %c0_4] : memref<16x128xf32, #tpu.memory_space<vmem>>, vector<16x128xf32>
    %cst = arith.constant 5.000000e-01 : f32
    %7 = vector.broadcast %cst : f32 to vector<16x128xf32>
    %8 = arith.mulf %7, %5 : vector<16x128xf32>
    %9 = math.tanh %8 : vector<16x128xf32>
    %cst_5 = arith.constant 5.000000e-01 : f32
    %10 = vector.broadcast %cst_5 : f32 to vector<16x128xf32>
    %11 = arith.mulf %10, %9 : vector<16x128xf32>
    %cst_6 = arith.constant 5.000000e-01 : f32
    %12 = vector.broadcast %cst_6 : f32 to vector<16x128xf32>
    %13 = arith.addf %11, %12 : vector<16x128xf32>
    %cst_7 = arith.constant 5.000000e-01 : f32
    %14 = vector.broadcast %cst_7 : f32 to vector<16x128xf32>
    %15 = arith.mulf %14, %9 : vector<16x128xf32>
    %cst_8 = arith.constant 5.000000e-01 : f32
    %16 = vector.broadcast %cst_8 : f32 to vector<16x128xf32>
    %17 = arith.subf %16, %15 : vector<16x128xf32>
    %cst_9 = arith.constant 5.000000e-02 : f32
    %18 = vector.broadcast %cst_9 : f32 to vector<16x128xf32>
    %19 = arith.addf %17, %18 : vector<16x128xf32>
    %cst_10 = arith.constant 1.000000e+00 : f32
    %20 = vector.broadcast %cst_10 : f32 to vector<16x128xf32>
    %21 = arith.minimumf %19, %20 : vector<16x128xf32>
    %cst_11 = arith.constant 0.000000e+00 : f32
    %22 = vector.broadcast %cst_11 : f32 to vector<16x128xf32>
    %23 = arith.cmpf ogt, %6, %22 : vector<16x128xf32>
    %24 = arith.select %23, %13, %21 : vector<16x128xi1>, vector<16x128xf32>
    %cst_12 = arith.constant 9.99999993E-9 : f32
    %25 = vector.broadcast %cst_12 : f32 to vector<16x128xf32>
    %26 = arith.maximumf %24, %25 : vector<16x128xf32>
    %27 = math.log %26 : vector<16x128xf32>
    %cst_13 = arith.constant 1.000000e+00 : f32
    %28 = vector.broadcast %cst_13 : f32 to vector<16x128xf32>
    %29 = arith.subf %28, %24 : vector<16x128xf32>
    %30 = arith.mulf %29, %29 : vector<16x128xf32>
    %31 = arith.mulf %30, %30 : vector<16x128xf32>
    %32 = arith.select %23, %29, %31 : vector<16x128xi1>, vector<16x128xf32>
    %33 = arith.mulf %27, %32 : vector<16x128xf32>
    %34 = vector.shape_cast %33 : vector<16x128xf32> to vector<2x8x128xf32>
    %cst_14 = arith.constant dense<0.000000e+00> : vector<8x128xf32>
    %35 = vector.multi_reduction <add>, %34, %cst_14 [0] : vector<2x8x128xf32> to vector<8x128xf32>
    %c0_15 = arith.constant 0 : index
    %c0_16 = arith.constant 0 : index
    %36 = vector.load %arg5[%c0_15, %c0_16] : memref<8x128xf32, #tpu.memory_space<vmem>>, vector<8x128xf32>
    %37 = arith.addf %36, %35 : vector<8x128xf32>
    %c0_17 = arith.constant 0 : index
    %c0_18 = arith.constant 0 : index
    %38 = vector.load %arg5[%c0_17, %c0_18] : memref<8x128xf32, #tpu.memory_space<vmem>>, vector<8x128xf32>
    tpu.vector_store %arg5[%c0_17, %c0_18], %37 {strides = array<i32>} : memref<8x128xf32, #tpu.memory_space<vmem>>, vector<8x128xf32>,
    return
  }
  func.func @transform_0(%arg0: i32, %arg1: i32, %arg2: i32) -> (i32, i32) {
    %c1_i32 = arith.constant 1 : i32
    %0 = arith.muli %arg0, %c1_i32 : i32
    %1 = arith.addi %0, %arg1 : i32
    %c0_i32 = arith.constant 0 : i32
    return %1, %arg2 : i32, i32
  }
  func.func @transform_1(%arg0: i32, %arg1: i32, %arg2: i32) -> (i32, i32) {
    %c1_i32 = arith.constant 1 : i32
    %0 = arith.muli %arg0, %c1_i32 : i32
    %1 = arith.addi %0, %arg1 : i32
    %c0_i32 = arith.constant 0 : i32
    return %1, %arg2 : i32, i32
  }
  func.func @transform_2(%arg0: i32, %arg1: i32, %arg2: i32) -> (i32, i32) {
    %c0_i32 = arith.constant 0 : i32
    %c0_i32_0 = arith.constant 0 : i32
    return %arg0, %c0_i32 : i32, i32
  }
}

</mosaic_0001>

<llo_original>
// kernel: tpu_custom_call.1
$region0: #{tpu_custom_call.1}
  #allocation0 [shape = 'u32[]', space=smem, size = 0x4, offset = 0x4, fixed_abs, tag = 'smem constant byte address 0x4 - core index']
  #allocation1 [shape = 'u32[144,128]{1,0:T(1,128)}', space=vmem, size = 0x12000, scoped, tag = 'internal scratch']
  %s0 = inlined_call_operand.hbm [shape: f32[16,128], index: 0, kind: input, shape index: {}]
  %s1 = inlined_call_operand.hbm [shape: f32[16,128], index: 1, kind: input, shape index: {}]
  %s2 = inlined_call_operand.hbm [shape: f32[8,128], index: 2, kind: output, shape index: {}]
  %s3 = sld [smem:[#allocation0]]
  $region30: #{tpu_custom_call.1} parent=0
    _
  %s5 = ssub.s32 1, %s3
  %s6 = scalar_select 0, %s5, %s3
  $region1: #{tpu_custom_call.1} parent=0
    #allocation2 [shape = 'u8[8192]{0}', space=vmem, size = 0x2000, scoped, tag = 'input window, operand 0, single buffered']
    #allocation3 [shape = 's32[1]{0}', space=sflag, size = 0x4, scoped, tag = 'scoped memory for tpu_custom_call.1']
    #allocation4 [shape = 's32[1]{0}', space=sflag, size = 0x4, scoped, tag = 'scoped memory for tpu_custom_call.1']
    #allocation5 [shape = 'u8[8192]{0}', space=vmem, size = 0x2000, scoped, tag = 'input window, operand 1, single buffered']
    #allocation6 [shape = 's32[1]{0}', space=sflag, size = 0x4, scoped, tag = 'scoped memory for tpu_custom_call.1']
    #allocation7 [shape = 'u8[4096]{0}', space=vmem, size = 0x1000, scoped, tag = 'output window, operand 0, single buffered']
    %7 = vsyncpa [#allocation3], 0
    %8 = vsyncpa [#allocation6], 0
    %9 = vsyncpa [#allocation4], 0
    // Predicated region
    $region2: #{tpu_custom_call.1} parent=1 // pred_check
      _
    $region3: #{tpu_custom_call.1} parent=1 // pred_check_branch
      %11 = sbr.rel (0) target = $region5
    $region4: #{tpu_custom_call.1} parent=1 // pred_region
      %s12 = sadd.s32 0, 0
      %s13 = smul.u32 2, %s12
      %s15 = ssub.s32 256, 256
      %16 = vsyncadd [#allocation3], %s15
      %s17 = smul.addr %s13, 128
      %s18 = scalar_lea.hbm %s0, %s17
      %s19 = sshll.u32 [#allocation2], 4
      %s20 = int_to_ptr.vmem [resolvable:$true] %s19
      %25 = dma.hbm_to_vmem [thread:$0]  %s18, 256, %s20, [#allocation3], 128, 128, 8
    $region5: #{tpu_custom_call.1} parent=1 // pred_fallthru
      _
    // Predicated region
    $region6: #{tpu_custom_call.1} parent=1 // pred_check
      _
    $region7: #{tpu_custom_call.1} parent=1 // pred_check_branch
      %27 = sbr.rel (0) target = $region9
    $region8: #{tpu_custom_call.1} parent=1 // pred_region
      %s28 = sadd.s32 0, 0
      %s29 = smul.u32 2, %s28
      %s31 = ssub.s32 256, 256
      %32 = vsyncadd [#allocation6], %s31
      %s33 = smul.addr %s29, 128
      %s34 = scalar_lea.hbm %s1, %s33
      %s35 = sshll.u32 [#allocation5], 4
      %s36 = int_to_ptr.vmem [resolvable:$true] %s35
      %41 = dma.hbm_to_vmem [thread:$0]  %s34, 256, %s36, [#allocation6], 128, 128, 8
    $region9: #{tpu_custom_call.1} parent=1 // pred_fallthru
      _
    // Predicated region
    $region10: #{tpu_custom_call.1} parent=1 // pred_check
      _
    $region11: #{tpu_custom_call.1} parent=1 // pred_check_branch
      %43 = sbr.rel (0) target = $region13
    $region12: #{tpu_custom_call.1} parent=1 // pred_region
      %44 = dma.done [#allocation3], 256
    $region13: #{tpu_custom_call.1} parent=1 // pred_fallthru
      _
    // Predicated region
    $region14: #{tpu_custom_call.1} parent=1 // pred_check
      _
    $region15: #{tpu_custom_call.1} parent=1 // pred_check_branch
      %46 = sbr.rel (0) target = $region17
    $region16: #{tpu_custom_call.1} parent=1 // pred_region
      %47 = dma.done [#allocation6], 256
    $region17: #{tpu_custom_call.1} parent=1 // pred_fallthru
      _
    %s48 = sadd.s32 0, 0
    %s49 = smul.u32 2, %s48
    %s50 = sadd.s32 0, 0
    %s51 = smul.u32 2, %s50
    %p52 = scmp.eq.s32.totalorder 0, 0
    %p53 = scmp.eq.s32.totalorder 0, 0
    %p54 = pnand %p52, %p53
    %p55 = pneg %p54
    // Predicated region
    $region18: #{tpu_custom_call.1} parent=1 // pred_check
      _
    $region19: #{tpu_custom_call.1} parent=1 // pred_check_branch
      %57 = sbr.rel (%p54) target = $region21
    $region20: #{tpu_custom_call.1} parent=1 // pred_region
      %58 = vst [vmem:[#allocation7] sm:$0xff] 0.0
    $region21: #{tpu_custom_call.1} parent=1 // pred_fallthru
      _
    %v59 = vld [vmem:[#allocation2] sm:$0xff]
    %v60 = vld [vmem:[#allocation2 + $0x8] sm:$0xff]
    %v61 = vld [vmem:[#allocation5] sm:$0xff]
    %v62 = vld [vmem:[#allocation5 + $0x8] sm:$0xff]
    %v63 = vmul.f32 %v59, 0.5
    %v64 = vmul.f32 %v60, 0.5
    %v65 = vtanh.pop %v63
    %v66 = vtanh.pop %v64
    %v67 = vmul.f32 %v65, 0.5
    %v68 = vmul.f32 %v66, 0.5
    %v69 = vadd.f32 %v67, 0.5
    %v70 = vadd.f32 %v68, 0.5
    %v71 = vsub.f32 0.5, %v67
    %v72 = vsub.f32 0.5, %v68
    %v73 = vadd.f32 %v71, 0.05
    %v74 = vadd.f32 %v72, 0.05
    %v75 = vmin.f32 %v73, 1.0
    %v76 = vmin.f32 %v74, 1.0
    %vm77 = vcmp.gt.f32.partialorder %v61, 0.0
    %vm78 = vcmp.gt.f32.partialorder %v62, 0.0
    %v79 = vsel %vm77, %v69, %v75
    %v80 = vsel %vm78, %v70, %v76
    %v81 = vmax.f32 %v79, 1e-08
    %v82 = vmax.f32 %v80, 1e-08
    %v83 = vlog2.pop %v81
    %v84 = vmul.f32 %v83, 0.6931472
    %v85 = vlog2.pop %v82
    %v86 = vmul.f32 %v85, 0.6931472
    %v87 = vsub.f32 1.0, %v79
    %v88 = vsub.f32 1.0, %v80
    %v89 = vmul.f32 %v87, %v87
    %v90 = vmul.f32 %v88, %v88
    %v91 = vmul.f32 %v89, %v89
    %v92 = vmul.f32 %v90, %v90
    %v93 = vsel %vm77, %v87, %v91
    %v94 = vsel %vm78, %v88, %v92
    %v95 = vmul.f32 %v84, %v93
    %v96 = vmul.f32 %v86, %v94
    %v97 = vadd.f32 %v95, %v96
    %v98 = vld [vmem:[#allocation7] sm:$0xff]
    %v99 = vadd.f32 %v98, %v97
    %100 = vst [vmem:[#allocation7] sm:$0xff] %v99
    // Predicated region
    $region22: #{tpu_custom_call.1} parent=1 // pred_check
      _
    $region23: #{tpu_custom_call.1} parent=1 // pred_check_branch
      %102 = sbr.rel (0) target = $region25
    $region24: #{tpu_custom_call.1} parent=1 // pred_region
      %s104 = ssub.s32 128, 128
      %105 = vsyncadd [#allocation4], %s104
      %s107 = sshll.u32 [#allocation7], 4
      %s108 = int_to_ptr.vmem [resolvable:$true] %s107
      %110 = dma.vmem_to_hbm [thread:$0]  %s108, 128, %s2, [#allocation4]
    $region25: #{tpu_custom_call.1} parent=1 // pred_fallthru
      _
    // Predicated region
    $region26: #{tpu_custom_call.1} parent=1 // pred_check
      _
    $region27: #{tpu_custom_call.1} parent=1 // pred_check_branch
      %112 = sbr.rel (0) target = $region29
    $region28: #{tpu_custom_call.1} parent=1 // pred_region
      %113 = dma.done [#allocation4], 128
    $region29: #{tpu_custom_call.1} parent=1 // pred_fallthru
      _
    %114 = vsyncpa [#allocation3], 1
    %115 = vsyncpa [#allocation6], 1
    %116 = vsyncpa [#allocation4], 1

</llo_original>
